<compile_context>
chip_gen: v6e
topology: v6e:2x2x1
jax: 0.10.0
libtpu: 0.0.40
codegen_flags: <defaults>
</compile_context>

<pallas_src>
from functools import partial

import jax
import jax.numpy as jnp
from jax import lax
from jax.experimental import pallas as pl
from jax.experimental.pallas import tpu as pltpu

EPS = 1e-5
_VMEM_LIMIT = 32 * 1024 * 1024  # explicit scoped-VMEM budget (safe on v5e/v6e/v7x)


def _bn1_relu_conv1_kernel(x_ref, s1_ref, t1_ref, w1_ref, h_ref, stats_ref):
    # x_ref: (1, Cin, HW) f32 image; s1/t1: (Cin, 1) folded bn1 scale/shift
    # w1_ref: (Cmid, Cin) bf16; h_ref: (1, Cmid, HW) bf16 out
    # stats_ref: (1, Cmid, 2) per-image bn2 partial [sum, sum_sq]
    x = x_ref[0, :, :]                                             # (Cin, HW)
    a1 = jnp.maximum(x * s1_ref[...] + t1_ref[...], 0.0)          # bn1 + relu (f32, VPU)
    h = jnp.dot(w1_ref[...], a1.astype(jnp.bfloat16),
                preferred_element_type=jnp.float32)                # 1x1 conv on MXU -> (Cmid, HW)
    s = jnp.sum(h, axis=1, keepdims=True)                          # (Cmid, 1)
    ss = jnp.sum(h * h, axis=1, keepdims=True)                     # (Cmid, 1)
    stats_ref[...] = jnp.concatenate([s, ss], axis=1)[None]        # (1, Cmid, 2)
    h_ref[...] = h.astype(jnp.bfloat16)[None]


def _bn2_relu_conv3x3_kernel(h_ref, s2_ref, t2_ref, w2t_ref, xm_ref, out_ref, *, W):
    # h_ref: (1, Cmid, HW) bf16; s2/t2: (Cmid, 1) folded bn2 scale/shift
    # w2t_ref: (G, 9*Cmid) bf16; xm_ref: (2, HW) f32 edge masks (dx=0 / dx=2)
    # out_ref: (1, G, HW) f32  (already NCHW order, lane-dense last dim)
    _, Cmid, HW = h_ref.shape

    # bn2 + relu in f32 on the VPU (256-lane wide).
    h = h_ref[0, :, :].astype(jnp.float32)                         # (Cmid, HW)
    a2 = jnp.maximum(h * s2_ref[...] + t2_ref[...], 0.0)

    # Zero-extend the flattened rows by W+1 on each side: a lane shift of this
    # buffer by dy*W + dx reproduces the 3x3 neighbourhood with the y-padding
    # already zero; x-padding is handled by the precomputed edge masks.
    zpad = jnp.zeros((Cmid, W + 1), jnp.float32)
    buf = jnp.concatenate([zpad, a2, zpad], axis=1)                # (Cmid, HW + 2W + 2)
    mask_l = xm_ref[0:1, :]                                        # kills x==0 (for dx=0)
    mask_r = xm_ref[1:2, :]                                        # kills x==W-1 (for dx=2)

    cols = []
    for dy in range(3):
        for dx in range(3):
            start = dy * W + dx
            piece = buf[:, start:start + HW]                       # static lane slice
            if dx == 0:
                piece = piece * mask_l
            elif dx == 2:
                piece = piece * mask_r
            cols.append(piece.astype(jnp.bfloat16))
    col = jnp.concatenate(cols, axis=0)                            # (9*Cmid, HW) bf16

    # (G, 9*Cmid) . (9*Cmid, HW) -> (G, HW): one MXU matmul, result lands
    # directly in NCHW order with a lane-dense minor dim.
    out = jnp.dot(w2t_ref[...], col, preferred_element_type=jnp.float32)
    out_ref[...] = out[None]


def dense_layer_forward(x_nchw, g1, b1, w1_oihw, g2, b2, w2_oihw):
    N, Cin, H, W = x_nchw.shape
    Cmid = w1_oihw.shape[0]        # 4 * growth_rate
    G = w2_oihw.shape[0]           # growth_rate
    HW = H * W
    M = N * HW

    x_f = x_nchw.astype(jnp.float32)
    x3 = x_f.reshape(N, Cin, HW)   # free reshape: NCHW is already channel-major

    # bn1 training-mode batch stats (biased variance): tiny XLA reduction,
    # folded into a per-channel scale/shift consumed by kernel 1.
    mean1 = jnp.mean(x3, axis=(0, 2))
    var1 = jnp.mean(jnp.square(x3 - mean1[None, :, None]), axis=(0, 2))
    scale1 = (g1.astype(jnp.float32) * lax.rsqrt(var1 + EPS)).reshape(Cin, 1)
    shift1 = b1.astype(jnp.float32).reshape(Cin, 1) - mean1.reshape(Cin, 1) * scale1

    # MXU operands in bf16 (accumulation stays f32 inside the kernels).
    w1_mat = w1_oihw[:, :, 0, 0].astype(jnp.bfloat16)                              # (Cmid, Cin)
    w2t = jnp.transpose(w2_oihw, (0, 2, 3, 1)).reshape(G, 9 * Cmid).astype(jnp.bfloat16)

    # ---- kernel 1: bn1 + relu + 1x1 conv, plus per-image bn2 partial stats ----
    h3, stats = pl.pallas_call(
        _bn1_relu_conv1_kernel,
        out_shape=(jax.ShapeDtypeStruct((N, Cmid, HW), jnp.bfloat16),
                   jax.ShapeDtypeStruct((N, Cmid, 2), jnp.float32)),
        grid=(N,),
        in_specs=[
            pl.BlockSpec((1, Cin, HW), lambda n: (n, 0, 0)),
            pl.BlockSpec((Cin, 1), lambda n: (0, 0)),
            pl.BlockSpec((Cin, 1), lambda n: (0, 0)),
            pl.BlockSpec((Cmid, Cin), lambda n: (0, 0)),
        ],
        out_specs=(
            pl.BlockSpec((1, Cmid, HW), lambda n: (n, 0, 0)),
            pl.BlockSpec((1, Cmid, 2), lambda n: (n, 0, 0)),
        ),
        compiler_params=pltpu.CompilerParams(
            dimension_semantics=("parallel",),
            vmem_limit_bytes=_VMEM_LIMIT),
    )(x3, scale1, shift1, w1_mat)

    # bn2 stats from the per-image partials (tiny XLA reduction, keeps the grid
    # axis fully "parallel" for the 2-TC megacore).
    ssum = jnp.sum(stats[:, :, 0], axis=0)
    ssq = jnp.sum(stats[:, :, 1], axis=0)
    mean2 = ssum / M
    var2 = jnp.maximum(ssq / M - jnp.square(mean2), 0.0)
    scale2 = (g2.astype(jnp.float32) * lax.rsqrt(var2 + EPS)).reshape(Cmid, 1)
    shift2 = b2.astype(jnp.float32).reshape(Cmid, 1) - mean2.reshape(Cmid, 1) * scale2

    # Edge masks for the x-padding of the 3x3 conv (precomputed once in XLA).
    xs = jnp.arange(HW, dtype=jnp.int32) % W
    xmask = jnp.stack([(xs != 0).astype(jnp.float32),
                       (xs != W - 1).astype(jnp.float32)], axis=0)   # (2, HW)

    # ---- kernel 2: bn2 + relu + zero-pad + 3x3 conv, fused per image ----
    conv_out = pl.pallas_call(
        partial(_bn2_relu_conv3x3_kernel, W=W),
        out_shape=jax.ShapeDtypeStruct((N, G, HW), jnp.float32),
        grid=(N,),
        in_specs=[
            pl.BlockSpec((1, Cmid, HW), lambda n: (n, 0, 0)),
            pl.BlockSpec((Cmid, 1), lambda n: (0, 0)),
            pl.BlockSpec((Cmid, 1), lambda n: (0, 0)),
            pl.BlockSpec((G, 9 * Cmid), lambda n: (0, 0)),
            pl.BlockSpec((2, HW), lambda n: (0, 0)),
        ],
        out_specs=pl.BlockSpec((1, G, HW), lambda n: (n, 0, 0)),
        compiler_params=pltpu.CompilerParams(
            dimension_semantics=("parallel",),
            vmem_limit_bytes=_VMEM_LIMIT),
    )(h3, scale2, shift2, w2t, xmask)

    out_nchw = conv_out.reshape(N, G, H, W)   # already NCHW: no transpose needed
    return jnp.concatenate([out_nchw, x_f], axis=1)


def ref_forward(x, g1, b1, w1_oihw, g2, b2, w2_oihw):
    """Pure-JAX f32 reference (training-mode BN + convs), NCHW."""
    def bn_relu(v, g, b):
        m = v.mean(axis=(0, 2, 3), keepdims=True)
        var = ((v - m) ** 2).mean(axis=(0, 2, 3), keepdims=True)
        y = (v - m) * lax.rsqrt(var + EPS) * g.reshape(1, -1, 1, 1) + b.reshape(1, -1, 1, 1)
        return jnp.maximum(y, 0.0)

    a1 = bn_relu(x, g1, b1)
    h = lax.conv_general_dilated(a1, w1_oihw, (1, 1), 'VALID',
                                 dimension_numbers=('NCHW', 'OIHW', 'NCHW'))
    a2 = bn_relu(h, g2, b2)
    o = lax.conv_general_dilated(a2, w2_oihw, (1, 1), ((1, 1), (1, 1)),
                                 dimension_numbers=('NCHW', 'OIHW', 'NCHW'))
    return jnp.concatenate([o, x], axis=1)


if __name__ == "__main__":
    # small shapes: batch=2, in_channels=4, spatial=16, growth_rate=4
    N, Cin, H, W = 2, 4, 16, 16
    growth = 4
    Cmid = 4 * growth

    key = jax.random.PRNGKey(0)
    kx, k1, k2, k3, k4, k5, k6 = jax.random.split(key, 7)

    x = jax.random.normal(kx, (N, Cin, H, W), jnp.float32)

    # deterministic parameter init (shapes from DenseLayer.__init__)
    g1 = 0.5 + jax.random.uniform(k1, (Cin,), jnp.float32)               # bn1.weight
    b1 = 0.1 * jax.random.normal(k2, (Cin,), jnp.float32)                # bn1.bias
    w1 = 0.2 * jax.random.normal(k3, (Cmid, Cin, 1, 1), jnp.float32)     # conv1.weight
    g2 = 0.5 + jax.random.uniform(k4, (Cmid,), jnp.float32)              # bn2.weight
    b2 = 0.1 * jax.random.normal(k5, (Cmid,), jnp.float32)               # bn2.bias
    w2 = 0.1 * jax.random.normal(k6, (growth, Cmid, 3, 3), jnp.float32)  # conv2.weight

    out = jax.block_until_ready(dense_layer_forward(x, g1, b1, w1, g2, b2, w2))
    ref = jax.block_until_ready(ref_forward(x, g1, b1, w1, g2, b2, w2))

    assert out.shape == (N, growth + Cin, H, W), out.shape
    # bf16 MXU operands (f32 accumulation) vs the pure-f32 reference:
    # expected relative error ~1e-3..1e-2.
    assert jnp.allclose(out, ref, rtol=3e-2, atol=3e-2), \
        float(jnp.max(jnp.abs(out - ref)))
    print("KERNEL_OK")
</pallas_src>

<mosaic_0001>
module attributes {stable_mosaic.version = 11 : i64} {
  func.func @_bn1_relu_conv1_kernel(%arg0: i32, %arg1: memref<1x4x256xf32, #tpu.memory_space<vmem>>, %arg2: memref<4x1xf32, #tpu.memory_space<vmem>>, %arg3: memref<4x1xf32, #tpu.memory_space<vmem>>, %arg4: memref<16x4xbf16, #tpu.memory_space<vmem>>, %arg5: memref<1x16x256xbf16, #tpu.memory_space<vmem>>, %arg6: memref<1x16x2xf32, #tpu.memory_space<vmem>>) attributes {dimension_semantics = [#tpu.dimension_semantics<parallel>], iteration_bounds = array<i64: 2>, scalar_prefetch = 0 : i64, scratch_operands = 0 : i64, tpu.core_type = #tpu.core_type<tc>, window_params = [{transform_indices = @transform_0, window_bounds = array<i64: 1, 4, 256>}, {pipeline_mode = #tpu.pipeline_mode<synchronous>, transform_indices = @transform_1, window_bounds = array<i64: 4, 1>}, {pipeline_mode = #tpu.pipeline_mode<synchronous>, transform_indices = @transform_2, window_bounds = array<i64: 4, 1>}, {pipeline_mode = #tpu.pipeline_mode<synchronous>, transform_indices = @transform_3, window_bounds = array<i64: 16, 4>}, {transform_indices = @transform_4, window_bounds = array<i64: 1, 16, 256>}, {transform_indices = @transform_5, window_bounds = array<i64: 1, 16, 2>}]} {
    %c0 = arith.constant 0 : index
    %c0_0 = arith.constant 0 : index
    %c0_1 = arith.constant 0 : index
    %0 = vector.load %arg1[%c0, %c0_0, %c0_1] : memref<1x4x256xf32, #tpu.memory_space<vmem>>, vector<1x4x256xf32>
    %1 = vector.shape_cast %0 : vector<1x4x256xf32> to vector<4x256xf32>
    %c0_2 = arith.constant 0 : index
    %c0_3 = arith.constant 0 : index
    %2 = vector.load %arg2[%c0_2, %c0_3] : memref<4x1xf32, #tpu.memory_space<vmem>>, vector<4x1xf32>
    %3 = vector.broadcast %2 : vector<4x1xf32> to vector<4x256xf32>
    %4 = arith.mulf %1, %3 : vector<4x256xf32>
    %c0_4 = arith.constant 0 : index
    %c0_5 = arith.constant 0 : index
    %5 = vector.load %arg3[%c0_4, %c0_5] : memref<4x1xf32, #tpu.memory_space<vmem>>, vector<4x1xf32>
    %6 = vector.broadcast %5 : vector<4x1xf32> to vector<4x256xf32>
    %7 = arith.addf %4, %6 : vector<4x256xf32>
    %cst = arith.constant 0.000000e+00 : f32
    %8 = vector.broadcast %cst : f32 to vector<4x256xf32>
    %9 = arith.maximumf %7, %8 : vector<4x256xf32>
    %c0_6 = arith.constant 0 : index
    %c0_7 = arith.constant 0 : index
    %10 = vector.load %arg4[%c0_6, %c0_7] : memref<16x4xbf16, #tpu.memory_space<vmem>>, vector<16x4xbf16>
    %11 = arith.truncf %9 : vector<4x256xf32> to vector<4x256xbf16>
    %cst_8 = arith.constant dense<0.000000e+00> : vector<16x256xf32>
    %12 = tpu.matmul %10, %11, %cst_8 {dimension_numbers = #tpu.dot_dimension_numbers<[1], [0], [0], [1], [0, 0, 1, 1], [], []>} : vector<16x4xbf16>, vector<4x256xbf16>, vector<16x256xf32> -> vector<16x256xf32>
    %cst_9 = arith.constant dense<0.000000e+00> : vector<16xf32>
    %13 = vector.multi_reduction <add>, %12, %cst_9 [1] : vector<16x256xf32> to vector<16xf32>
    %14 = vector.shape_cast %13 : vector<16xf32> to vector<16x1xf32>
    %15 = arith.mulf %12, %12 : vector<16x256xf32>
    %cst_10 = arith.constant dense<0.000000e+00> : vector<16xf32>
    %16 = vector.multi_reduction <add>, %15, %cst_10 [1] : vector<16x256xf32> to vector<16xf32>
    %17 = vector.shape_cast %16 : vector<16xf32> to vector<16x1xf32>
    %18 = tpu.concatenate %14, %17 in 1 : vector<16x1xf32>, vector<16x1xf32> -> vector<16x2xf32>
    %19 = vector.shape_cast %18 : vector<16x2xf32> to vector<1x16x2xf32>
    %c0_11 = arith.constant 0 : index
    %c0_12 = arith.constant 0 : index
    %c0_13 = arith.constant 0 : index
    %20 = vector.load %arg6[%c0_11, %c0_12, %c0_13] : memref<1x16x2xf32, #tpu.memory_space<vmem>>, vector<1x16x2xf32>
    tpu.vector_store %arg6[%c0_11, %c0_12, %c0_13], %19 {strides = array<i32>} : memref<1x16x2xf32, #tpu.memory_space<vmem>>, vector<1x16x2xf32>,
    %21 = arith.truncf %12 : vector<16x256xf32> to vector<16x256xbf16>
    %22 = vector.shape_cast %21 : vector<16x256xbf16> to vector<1x16x256xbf16>
    %c0_14 = arith.constant 0 : index
    %c0_15 = arith.constant 0 : index
    %c0_16 = arith.constant 0 : index
    %23 = vector.load %arg5[%c0_14, %c0_15, %c0_16] : memref<1x16x256xbf16, #tpu.memory_space<vmem>>, vector<1x16x256xbf16>
    tpu.vector_store %arg5[%c0_14, %c0_15, %c0_16], %22 {strides = array<i32>} : memref<1x16x256xbf16, #tpu.memory_space<vmem>>, vector<1x16x256xbf16>,
    return
  }
  func.func @transform_0(%arg0: i32) -> (i32, i32, i32) {
    %c0_i32 = arith.constant 0 : i32
    %c0_i32_0 = arith.constant 0 : i32
    %c0_i32_1 = arith.constant 0 : i32
    return %arg0, %c0_i32, %c0_i32_0 : i32, i32, i32
  }
  func.func @transform_1(%arg0: i32) -> (i32, i32) {
    %c0_i32 = arith.constant 0 : i32
    %c0_i32_0 = arith.constant 0 : i32
    %c0_i32_1 = arith.constant 0 : i32
    return %c0_i32, %c0_i32_0 : i32, i32
  }
  func.func @transform_2(%arg0: i32) -> (i32, i32) {
    %c0_i32 = arith.constant 0 : i32
    %c0_i32_0 = arith.constant 0 : i32
    %c0_i32_1 = arith.constant 0 : i32
    return %c0_i32, %c0_i32_0 : i32, i32
  }
  func.func @transform_3(%arg0: i32) -> (i32, i32) {
    %c0_i32 = arith.constant 0 : i32
    %c0_i32_0 = arith.constant 0 : i32
    %c0_i32_1 = arith.constant 0 : i32
    return %c0_i32, %c0_i32_0 : i32, i32
  }
  func.func @transform_4(%arg0: i32) -> (i32, i32, i32) {
    %c0_i32 = arith.constant 0 : i32
    %c0_i32_0 = arith.constant 0 : i32
    %c0_i32_1 = arith.constant 0 : i32
    return %arg0, %c0_i32, %c0_i32_0 : i32, i32, i32
  }
  func.func @transform_5(%arg0: i32) -> (i32, i32, i32) {
    %c0_i32 = arith.constant 0 : i32
    %c0_i32_0 = arith.constant 0 : i32
    %c0_i32_1 = arith.constant 0 : i32
    return %arg0, %c0_i32, %c0_i32_0 : i32, i32, i32
  }
}

</mosaic_0001>

<llo_original>
// kernel: tpu_custom_call.1
$region0: #{tpu_custom_call.1}
  #allocation0 [shape = 'u32[]', space=smem, size = 0x4, offset = 0x4, fixed_abs, tag = 'smem constant byte address 0x4 - core index']
  #allocation1 [shape = 'u32[144,128]{1,0:T(1,128)}', space=vmem, size = 0x12000, scoped, tag = 'internal scratch']
  %s0 = inlined_call_operand.vmem [shape: f32[2,4,256], index: 0, kind: input, shape index: {}]
  %s1 = inlined_call_operand.vmem [shape: f32[4,1], index: 1, kind: input, shape index: {}]
  %s2 = inlined_call_operand.vmem [shape: f32[4,1], index: 2, kind: input, shape index: {}]
  %s3 = inlined_call_operand.vmem [shape: bf16[16,4], index: 3, kind: input, shape index: {}]
  %s4 = inlined_call_operand.hbm [shape: bf16[2,16,256], index: 4, kind: output, shape index: {0}]
  %s5 = inlined_call_operand.vmem [shape: f32[2,16,2], index: 5, kind: output, shape index: {1}]
  %6 = xla_tuple %s4, %s5
  %s7 = sld [smem:[#allocation0]]
  $region57: #{tpu_custom_call.1} parent=0
    _
  %s9 = ssub.s32 1, %s7
  %s10 = scalar_select 0, %s9, %s7
  $region1: #{tpu_custom_call.1} parent=0
    #allocation2 [shape = 'u8[16384]{0}', space=vmem, size = 0x4000, scoped, tag = 'output window, operand 0']
    #allocation3 [shape = 's32[2]{0}', space=sflag, size = 0x8, scoped, tag = 'scoped memory for tpu_custom_call.1']
    %11 = vsyncpa [#allocation3], 0
    %s12 = scalar_lea.sflag [#allocation3], 1
    %13 = vsyncpa %s12, 0
    loop: start=0, step=1, limit=4
    $region2: #{tpu_custom_call.1} parent=1 // loop_pre_header
      _
    $region3: #{tpu_custom_call.1} parent=1 // loop_header
      %s15 = sphi 0, %s19
      %p16 = scmp.ge.s32.totalorder %s15, 4
      %s25 = sphi 0, %s27
      %s28 = sphi 0, %s25
      %s29 = sphi 0, %s28
      %s45 = sphi 0, %s29
      %s49 = sphi 0, %s49
      %s51 = sphi 0, %s49
      %s52 = sphi 0, %s51
      %s66 = sphi 0, %s52
      %s70 = sphi 0, %s70
      %s72 = sphi 0, %s70
      %s73 = sphi 0, %s72
      %s87 = sphi 0, %s73
      %s91 = sphi 0, %s91
      %s93 = sphi 0, %s91
      %s94 = sphi 0, %s93
      %s108 = sphi 0, %s94
      %s114 = sphi 0, %s116
      %s117 = sphi 0, %s114
      %s118 = sphi 0, %s117
      %s134 = sphi 0, %s118
      %s140 = sphi 0, %s142
      %s143 = sphi 0, %s140
      %s144 = sphi 0, %s143
      %s160 = sphi 0, %s144
    $region4: #{tpu_custom_call.1} parent=1 // loop_header_branch
      %18 = sbr.rel (%p16) target = $region8
    $region5: #{tpu_custom_call.1} parent=1 // loop_body
      %s20 = ssub.s32 %s15, 1
      %s21 = ssub.s32 %s15, 2
      %s22 = sadd.s32 %s15, 1
      %s23 = ssub.s32 %s15, %s22
      %p24 = scmp.eq.s32.totalorder %s23, 0
      %s26 = sadd.s32 %s25, 1
      %s27 = scalar_select %p24, %s25, %s26
      %p30 = pneg %p24
      %p31 = scmp.eq.s32.totalorder %s15, 1
      %p32 = por %p30, %p31
      %p33 = scmp.ne.s32.totalorder %s25, %s28
      %p34 = scmp.eq.s32.totalorder %s15, 0
      %p35 = por %p33, %p34
      %p36 = scmp.ne.s32.totalorder %s25, %s28
      %p37 = scmp.eq.s32.totalorder %s20, 1
      %p38 = por %p36, %p37
      %p39 = scmp.ne.s32.totalorder %s28, %s29
      %p40 = scmp.eq.s32.totalorder %s20, 0
      %p41 = por %p39, %p40
      %p42 = scmp.ne.s32.totalorder %s28, %s29
      %p43 = scmp.eq.s32.totalorder %s21, 1
      %p44 = por %p42, %p43
      %p46 = scmp.ne.s32.totalorder %s29, %s45
      %p47 = scmp.eq.s32.totalorder %s21, 0
      %p48 = por %p46, %p47
      %s50 = sadd.s32 %s49, 1
      %p53 = scmp.eq.s32.totalorder %s15, 1
      %p54 = scmp.ne.s32.totalorder %s49, %s51
      %p55 = scmp.eq.s32.totalorder %s15, 0
      %p56 = por %p54, %p55
      %p57 = scmp.ne.s32.totalorder %s49, %s51
      %p58 = scmp.eq.s32.totalorder %s20, 1
      %p59 = por %p57, %p58
      %p60 = scmp.ne.s32.totalorder %s51, %s52
      %p61 = scmp.eq.s32.totalorder %s20, 0
      %p62 = por %p60, %p61
      %p63 = scmp.ne.s32.totalorder %s51, %s52
      %p64 = scmp.eq.s32.totalorder %s21, 1
      %p65 = por %p63, %p64
      %p67 = scmp.ne.s32.totalorder %s52, %s66
      %p68 = scmp.eq.s32.totalorder %s21, 0
      %p69 = por %p67, %p68
      %s71 = sadd.s32 %s70, 1
      %p74 = scmp.eq.s32.totalorder %s15, 1
      %p75 = scmp.ne.s32.totalorder %s70, %s72
      %p76 = scmp.eq.s32.totalorder %s15, 0
      %p77 = por %p75, %p76
      %p78 = scmp.ne.s32.totalorder %s70, %s72
      %p79 = scmp.eq.s32.totalorder %s20, 1
      %p80 = por %p78, %p79
      %p81 = scmp.ne.s32.totalorder %s72, %s73
      %p82 = scmp.eq.s32.totalorder %s20, 0
      %p83 = por %p81, %p82
      %p84 = scmp.ne.s32.totalorder %s72, %s73
      %p85 = scmp.eq.s32.totalorder %s21, 1
      %p86 = por %p84, %p85
      %p88 = scmp.ne.s32.totalorder %s73, %s87
      %p89 = scmp.eq.s32.totalorder %s21, 0
      %p90 = por %p88, %p89
      %s92 = sadd.s32 %s91, 1
      %p95 = scmp.eq.s32.totalorder %s15, 1
      %p96 = scmp.ne.s32.totalorder %s91, %s93
      %p97 = scmp.eq.s32.totalorder %s15, 0
      %p98 = por %p96, %p97
      %p99 = scmp.ne.s32.totalorder %s91, %s93
      %p100 = scmp.eq.s32.totalorder %s20, 1
      %p101 = por %p99, %p100
      %p102 = scmp.ne.s32.totalorder %s93, %s94
      %p103 = scmp.eq.s32.totalorder %s20, 0
      %p104 = por %p102, %p103
      %p105 = scmp.ne.s32.totalorder %s93, %s94
      %p106 = scmp.eq.s32.totalorder %s21, 1
      %p107 = por %p105, %p106
      %p109 = scmp.ne.s32.totalorder %s94, %s108
      %p110 = scmp.eq.s32.totalorder %s21, 0
      %p111 = por %p109, %p110
      %s112 = ssub.s32 %s15, %s22
      %p113 = scmp.eq.s32.totalorder %s112, 0
      %s115 = sadd.s32 %s114, 1
      %s116 = scalar_select %p113, %s114, %s115
      %p119 = pneg %p113
      %p120 = scmp.eq.s32.totalorder %s15, 1
      %p121 = por %p119, %p120
      %p122 = scmp.ne.s32.totalorder %s114, %s117
      %p123 = scmp.eq.s32.totalorder %s15, 0
      %p124 = por %p122, %p123
      %p125 = scmp.ne.s32.totalorder %s114, %s117
      %p126 = scmp.eq.s32.totalorder %s20, 1
      %p127 = por %p125, %p126
      %p128 = scmp.ne.s32.totalorder %s117, %s118
      %p129 = scmp.eq.s32.totalorder %s20, 0
      %p130 = por %p128, %p129
      %p131 = scmp.ne.s32.totalorder %s117, %s118
      %p132 = scmp.eq.s32.totalorder %s21, 1
      %p133 = por %p131, %p132
      %p135 = scmp.ne.s32.totalorder %s118, %s134
      %p136 = scmp.eq.s32.totalorder %s21, 0
      %p137 = por %p135, %p136
      %s138 = ssub.s32 %s15, %s22
      %p139 = scmp.eq.s32.totalorder %s138, 0
      %s141 = sadd.s32 %s140, 1
      %s142 = scalar_select %p139, %s140, %s141
      %p145 = pneg %p139
      %p146 = scmp.eq.s32.totalorder %s15, 1
      %p147 = por %p145, %p146
      %p148 = scmp.ne.s32.totalorder %s140, %s143
      %p149 = scmp.eq.s32.totalorder %s15, 0
      %p150 = por %p148, %p149
      %p151 = scmp.ne.s32.totalorder %s140, %s143
      %p152 = scmp.eq.s32.totalorder %s20, 1
      %p153 = por %p151, %p152
      %p154 = scmp.ne.s32.totalorder %s143, %s144
      %p155 = scmp.eq.s32.totalorder %s20, 0
      %p156 = por %p154, %p155
      %p157 = scmp.ne.s32.totalorder %s143, %s144
      %p158 = scmp.eq.s32.totalorder %s21, 1
      %p159 = por %p157, %p158
      %p161 = scmp.ne.s32.totalorder %s144, %s160
      %p162 = scmp.eq.s32.totalorder %s21, 0
      %p163 = por %p161, %p162
      %p164 = scmp.le.s32.totalorder 1, %s15
      %p165 = scmp.lt.s32.totalorder %s15, 3
      %p166 = pnand %p164, %p165
      %p167 = pneg %p166
      // Predicated region
      $region9: #{tpu_custom_call.1} parent=5 // pred_check
        _
      $region10: #{tpu_custom_call.1} parent=5 // pred_check_branch
        %169 = sbr.rel (%p166) target = $region12
      $region11: #{tpu_custom_call.1} parent=5 // pred_region
        %s170 = ssub.s32 %s15, 1
        // Predicated region
        $region13: #{tpu_custom_call.1} parent=11 // pred_check
          %p171 = pneg %p62
        $region14: #{tpu_custom_call.1} parent=11 // pred_check_branch
          %173 = sbr.rel (%p171) target = $region16
        $region15: #{tpu_custom_call.1} parent=11 // pred_region
          _
        $region16: #{tpu_custom_call.1} parent=11 // pred_fallthru
          _
        // Predicated region
        $region17: #{tpu_custom_call.1} parent=11 // pred_check
          %p174 = pneg %p83
        $region18: #{tpu_custom_call.1} parent=11 // pred_check_branch
          %176 = sbr.rel (%p174) target = $region20
        $region19: #{tpu_custom_call.1} parent=11 // pred_region
          _
        $region20: #{tpu_custom_call.1} parent=11 // pred_fallthru
          _
        // Predicated region
        $region21: #{tpu_custom_call.1} parent=11 // pred_check
          %p177 = pneg %p104
        $region22: #{tpu_custom_call.1} parent=11 // pred_check_branch
          %179 = sbr.rel (%p177) target = $region24
        $region23: #{tpu_custom_call.1} parent=11 // pred_region
          _
        $region24: #{tpu_custom_call.1} parent=11 // pred_fallthru
          _
      $region12: #{tpu_custom_call.1} parent=5 // pred_fallthru
        _
      %p180 = scmp.lt.s32.totalorder %s15, 2
      // Predicated region
      $region25: #{tpu_custom_call.1} parent=5 // pred_check
        %p181 = pneg %p180
      $region26: #{tpu_custom_call.1} parent=5 // pred_check_branch
        %183 = sbr.rel (%p181) target = $region28
      $region27: #{tpu_custom_call.1} parent=5 // pred_region
        // Predicated region
        $region29: #{tpu_custom_call.1} parent=27 // pred_check
          %p184 = pneg %p35
        $region30: #{tpu_custom_call.1} parent=27 // pred_check_branch
          %186 = sbr.rel (%p184) target = $region32
        $region31: #{tpu_custom_call.1} parent=27 // pred_region
          %p187 = scmp.lt.s32.totalorder %s15, 1
          %s188 = scalar_select %p187, %s15, 1
          %s189 = smul.addr %s188, 2
          %s190 = smul.addr %s189, 4
          %s191 = scalar_lea.vmem %s0, %s190
        $region32: #{tpu_custom_call.1} parent=27 // pred_fallthru
          _
      $region28: #{tpu_custom_call.1} parent=5 // pred_fallthru
        _
      %p192 = scmp.le.s32.totalorder 1, %s15
      %p193 = scmp.lt.s32.totalorder %s15, 3
      %p194 = pnand %p192, %p193
      %p195 = pneg %p194
      // Predicated region
      $region33: #{tpu_custom_call.1} parent=5 // pred_check
        _
      $region34: #{tpu_custom_call.1} parent=5 // pred_check_branch
        %197 = sbr.rel (%p194) target = $region36
      $region35: #{tpu_custom_call.1} parent=5 // pred_region
        %s198 = ssub.s32 %s15, 1
        %p199 = scmp.lt.s32.totalorder %s20, 1
        %s200 = scalar_select %p199, %s20, 1
        %s201 = smul.addr %s200, 2
        %s202 = smul.addr %s201, 4
        %s203 = scalar_lea.vmem %s0, %s202
        %p204 = pneg %p41
        %p205 = pneg %p38
        %p206 = pneg %p62
        %p207 = pneg %p59
        %p208 = pneg %p83
        %p209 = pneg %p80
        %p210 = pneg %p104
        %p211 = pneg %p101
        %p212 = pneg %p130
        %p213 = pneg %p127
        %s214 = sand.u32 %s117, 1
        %s215 = scalar_lea.sflag [#allocation3], %s214
        %s216 = sand.u32 %s117, 1
        %s217 = smul.addr %s216, 16
        %s218 = scalar_lea.vmem [#allocation2], %s217
        %p219 = pneg %p156
        %p220 = pneg %p153
        %p221 = scmp.lt.s32.totalorder %s20, 1
        %s222 = scalar_select %p221, %s20, 1
        %s223 = smul.addr %s222, 2
        %s224 = smul.addr %s223, 8
        %s225 = scalar_lea.vmem %s5, %s224
        %p226 = scmp.lt.s32.totalorder %s20, 1
        %s227 = scalar_select %p226, %s20, 1
        %s228 = smul.addr %s227, 2
        %s229 = smul.addr %s228, 4
        %s230 = scalar_lea.vmem %s0, %s229
        %p231 = scmp.lt.s32.totalorder %s20, 1
        %s232 = scalar_select %p231, %s20, 1
        %s233 = smul.addr %s232, 2
        %s234 = smul.addr %s233, 8
        %s235 = scalar_lea.vmem %s5, %s234
        %v237 = vld [vmem:[%s230] sm:$0xff]
        %v238 = vld [vmem:[%s1] sm:$0xf]
        %240 = vset.pattern.permute.xlu0 0
        %241 = vperm.xlu0 %240, %v238
        %v242 = vpop.permute.xlu0 %241
        %v244 = vunpack.c.l.s4 839922192
        %v245 = vunpack.c.0.s8 %v244
        %v246 = vlaneseq
        %v247 = vshrl.u32 %v246, 7
        %v248 = vsub.s32 %v245, %v247
        %v249 = vrot.slane %v242, %v248
        %v251 = vmul.f32 %v237, %v249
        %v252 = vld [vmem:[%s2] sm:$0xf]
        %254 = vset.pattern.permute.xlu0 0
        %255 = vperm.xlu0 %254, %v252
        %v256 = vpop.permute.xlu0 %255
        %v258 = vunpack.c.l.s4 839922192
        %v259 = vunpack.c.0.s8 %v258
        %v260 = vlaneseq
        %v261 = vshrl.u32 %v260, 7
        %v262 = vsub.s32 %v259, %v261
        %v263 = vrot.slane %v256, %v262
        %v265 = vadd.f32 %v251, %v263
        %v266 = vmax.f32 %v265, 0.0
        %v267 = vld [vmem:[%s3] sm:$0xf]
        %v268 = vld [vmem:[%s3 + $0x4] sm:$0xf]
        %v270 = vcombine.high %v266, %v266
        %v272 = vpack.c.bf16 %v266, %v266
        %v273 = vpack.c.bf16 %v270, %v270
        %v276 = vunpack.c.l.b16 %v267
        %v277 = vunpack.c.l.b16 %v268
        %v278 = vpack.c.b16 %v277, %v276
        %vm279 = vcmask 31744
        %v281 = vsel %vm279, %v278, 0
        %vm283 = vcmask 1041408
        %v285 = vsel %vm283, %v272, 0
        %v288 = vsel %vm283, %v273, 0
        %290 = vmatprep.subr.bf16.mxu0 0
        %291 = vmatpush1.bf16.msra.mxu0 0
        %292 = vmatprep.subr.bf16.mxu0 0
        %293 = vmatpush1.bf16.msra.mxu0 0
        %294 = vmatprep.subr.bf16.mxu0 0
        %295 = vmatpush1.bf16.msra.mxu0 0
        %296 = vmatprep.subr.bf16.mxu0 0
        %297 = vmatpush1.bf16.msra.mxu0 0
        %298 = vmatprep.subr.bf16.mxu0 0
        %299 = vmatpush1.bf16.msra.mxu0 0
        %300 = vmatprep.subr.bf16.mxu0 0
        %301 = vmatpush1.bf16.msra.mxu0 0
        %302 = vmatprep.subr.bf16.mxu0 0
        %303 = vmatpush1.bf16.msra.mxu0 0
        %304 = vmatprep.subr.bf16.mxu0 %v288
        %305 = vmatpush1.bf16.msra.mxu0 %v285
        %306 = vmatprep.subr.bf16.mxu0 0
        %307 = vmatpush2.bf16.msra.mxu0 0
        %308 = vmatprep.subr.bf16.mxu0 0
        %309 = vmatpush2.bf16.msra.mxu0 0
        %310 = vmatprep.subr.bf16.mxu0 0
        %311 = vmatpush2.bf16.msra.mxu0 0
        %312 = vmatprep.subr.bf16.mxu0 0
        %313 = vmatpush2.bf16.msra.mxu0 0
        %314 = vmatprep.subr.bf16.mxu0 0
        %315 = vmatpush2.bf16.msra.mxu0 0
        %316 = vmatprep.subr.bf16.mxu0 0
        %317 = vmatpush2.bf16.msra.mxu0 0
        %318 = vmatprep.subr.bf16.mxu0 0
        %319 = vmatpush2.bf16.msra.mxu0 0
        %320 = vmatprep.subr.bf16.mxu0 0
        %321 = vmatpush2.bf16.msra.mxu0 0
        %322 = vmatprep.mubr.bf16.mxu0 0
        %323 = vmatmul.mubr.bf16.gmra.mxu0 %v281
        %v324 = vpop.f32.mrf.mxu0
        %v325 = vadd.f32 0.0, %v324
        %v326 = vpop.f32.mrf.mxu0
        %v327 = vadd.f32 0.0, %v326
        %v328 = vpop.f32.mrf.mxu0
        %v329 = vadd.f32 0.0, %v328
        %v330 = vpop.f32.mrf.mxu0
        %v331 = vadd.f32 0.0, %v330
        %332 = vdwg.mxu0
        %v333 = vadd.f32 %v325, %v327
        %334 = vadd.xlane.f32.xlu0 %v333
        %v335 = vpop.xlane.xlu0 %334
        %v336 = vadd.f32 %v329, %v331
        %337 = vadd.xlane.f32.xlu0 %v336
        %v338 = vpop.xlane.xlu0 %337
        %v339 = vmul.f32 %v325, %v325
        %v340 = vmul.f32 %v327, %v327
        %v341 = vmul.f32 %v329, %v329
        %v342 = vmul.f32 %v331, %v331
        %v343 = vadd.f32 %v339, %v340
        %344 = vadd.xlane.f32.xlu0 %v343
        %v345 = vpop.xlane.xlu0 %344
        %v346 = vadd.f32 %v341, %v342
        %347 = vadd.xlane.f32.xlu0 %v346
        %v348 = vpop.xlane.xlu0 %347
        %vm349 = vcmask 7168
        %v350 = vsel %vm349, %v335, %v345
        %v351 = vsel %vm349, %v338, %v348
        %vm352 = vcmask 15360
        %353 = vst.msk [vmem:[%s235] sm:$0xff] %vm352, %v350
        %354 = vst.msk [vmem:[%s235 + $0x8] sm:$0xff] %vm352, %v351
        %v355 = vpack.c.bf16 %v329, %v325
        %v356 = vpack.c.bf16 %v331, %v327
        %v359 = vunpack.c.l.b16 %v355
        %v360 = vunpack.c.l.b16 %v356
        %v361 = vunpack.c.h.b16 %v355
        %v362 = vunpack.c.h.b16 %v356
        %v363 = vpack.c.b16 %v360, %v359
        %v364 = vpack.c.b16 %v362, %v361
        %367 = vst [vmem:[%s218] sm:$0xff] %v363
        %368 = vst [vmem:[%s218 + $0x8] sm:$0xff] %v364
        %s369 = sand.u32 %s117, 1
        %s370 = scalar_lea.sflag [#allocation3], %s369
        %s371 = sand.u32 %s117, 1
        %s372 = smul.addr %s371, 16
        %s373 = scalar_lea.vmem [#allocation2], %s372
        %p374 = scmp.lt.s32.totalorder %s20, 1
        %s375 = scalar_select %p374, %s20, 1
        %s376 = smul.addr %s375, 2
        %s377 = smul.addr %s376, 8
        %s378 = scalar_lea.vmem %s5, %s377
        // Predicated region
        $region37: #{tpu_custom_call.1} parent=35 // pred_check
          %p379 = pneg %p127
        $region38: #{tpu_custom_call.1} parent=35 // pred_check_branch
          %381 = sbr.rel (%p379) target = $region40
        $region39: #{tpu_custom_call.1} parent=35 // pred_region
          %s383 = ssub.s32 256, 256
          %384 = vsyncadd %s370, %s383
          %s385 = smul.addr %s20, 4
          %s386 = smul.addr %s385, 64
          %s387 = scalar_lea.hbm %s4, %s386
          %s388 = sshll.u32 %s373, 4
          %s389 = int_to_ptr.vmem [resolvable:$true] %s388
          %394 = dma.vmem_to_hbm [thread:$0]  %s389, 256, %s387, %s370, 128, 128, 8
        $region40: #{tpu_custom_call.1} parent=35 // pred_fallthru
          _
        // Predicated region
        $region41: #{tpu_custom_call.1} parent=35 // pred_check
          %p395 = pneg %p153
        $region42: #{tpu_custom_call.1} parent=35 // pred_check_branch
          %397 = sbr.rel (%p395) target = $region44
        $region43: #{tpu_custom_call.1} parent=35 // pred_region
          _
        $region44: #{tpu_custom_call.1} parent=35 // pred_fallthru
          _
      $region36: #{tpu_custom_call.1} parent=5 // pred_fallthru
        _
      %p398 = scmp.le.s32.totalorder 2, %s15
      // Predicated region
      $region45: #{tpu_custom_call.1} parent=5 // pred_check
        %p399 = pneg %p398
      $region46: #{tpu_custom_call.1} parent=5 // pred_check_branch
        %401 = sbr.rel (%p399) target = $region48
      $region47: #{tpu_custom_call.1} parent=5 // pred_region
        %s402 = ssub.s32 %s15, 2
        // Predicated region
        $region49: #{tpu_custom_call.1} parent=47 // pred_check
          %p403 = pneg %p133
        $region50: #{tpu_custom_call.1} parent=47 // pred_check_branch
          %405 = sbr.rel (%p403) target = $region52
        $region51: #{tpu_custom_call.1} parent=47 // pred_region
          %s406 = sand.u32 %s118, 1
          %s407 = scalar_lea.sflag [#allocation3], %s406
          %s408 = sand.u32 %s118, 1
          %s409 = smul.addr %s408, 16
          %s410 = scalar_lea.vmem [#allocation2], %s409
          %411 = dma.done %s407, 256
        $region52: #{tpu_custom_call.1} parent=47 // pred_fallthru
          _
        // Predicated region
        $region53: #{tpu_custom_call.1} parent=47 // pred_check
          %p412 = pneg %p159
        $region54: #{tpu_custom_call.1} parent=47 // pred_check_branch
          %414 = sbr.rel (%p412) target = $region56
        $region55: #{tpu_custom_call.1} parent=47 // pred_region
          %p415 = scmp.lt.s32.totalorder %s21, 1
          %s416 = scalar_select %p415, %s21, 1
          %s417 = smul.addr %s416, 2
          %s418 = smul.addr %s417, 8
          %s419 = scalar_lea.vmem %s5, %s418
        $region56: #{tpu_custom_call.1} parent=47 // pred_fallthru
          _
      $region48: #{tpu_custom_call.1} parent=5 // pred_fallthru
        _
    $region6: #{tpu_custom_call.1} parent=1 // loop_footer
      %s19 = sadd.s32 1, %s15
    $region7: #{tpu_custom_call.1} parent=1 // loop_footer_branch
      %14 = sbr.rel target = $region3
    $region8: #{tpu_custom_call.1} parent=1 // loop_exit
      _
    %420 = vsyncpa [#allocation3], 1
    %s421 = scalar_lea.sflag [#allocation3], 1
    %422 = vsyncpa %s421, 1

</llo_original>
